<compile_context>
chip_gen: v5e
topology: v5e:2x2
jax: 0.10.0
libtpu: 0.0.40
codegen_flags: <defaults>
</compile_context>

<pallas_src>
import jax
import jax.numpy as jnp
from jax import lax
from jax.experimental import pallas as pl
from jax.experimental.pallas import tpu as pltpu

FG_IOU_THRESH = 0.5
BG_IOU_THRESH = 0.4
FOCAL_ALPHA = 0.25


def _round_up(x, m):
    return ((x + m - 1) // m) * m


def _vmem_budget():
    """Per-generation VMEM limit (bytes): v7x has 64 MiB/TC, v5e/v6e 128 MiB."""
    cap = 128 * 1024 * 1024
    try:
        cap = int(getattr(pltpu.get_tpu_info(), "vmem_capacity_bytes", cap))
    except Exception:
        cap = 64 * 1024 * 1024          # conservative fallback
    if cap >= 100 * 1024 * 1024:        # v5e / v6e class
        return 80 * 1024 * 1024
    return min(48 * 1024 * 1024, cap * 3 // 4)   # v7x class


def _iou_vs_anchors(tbr, an, avalid):
    """IoU of gt boxes vs anchors, anchors on sublanes.

    tbr:    [Bt, 4, G]  gt boxes as coordinate rows (x1;y1;x2;y2)
    an:     [Bt, At, 4] anchors, native layout
    avalid: [At, 1]     1.0 for real anchors, 0.0 for A-padding rows
    returns [Bt, At, G]
    """
    gx1 = tbr[:, 0:1, :]; gy1 = tbr[:, 1:2, :]
    gx2 = tbr[:, 2:3, :]; gy2 = tbr[:, 3:4, :]            # [Bt, 1, G]
    ax1 = an[:, :, 0:1]; ay1 = an[:, :, 1:2]
    ax2 = an[:, :, 2:3]; ay2 = an[:, :, 3:4]              # [Bt, At, 1]
    area_g = (gx2 - gx1) * (gy2 - gy1)
    area_a = (ax2 - ax1) * (ay2 - ay1)
    iw = jnp.maximum(jnp.minimum(ax2, gx2) - jnp.maximum(ax1, gx1), 0.0)
    ih = jnp.maximum(jnp.minimum(ay2, gy2) - jnp.maximum(ay1, gy1), 0.0)
    inter = iw * ih                                       # [Bt, At, G]
    union = jnp.maximum(area_a + area_g - inter, 1e-9)
    # exact divide: IoU values near the 0.4/0.5 thresholds decide fg/bg.
    return (inter / union) * avalid


def yolov4_loss(pred_boxes, pred_labels, target_boxes, target_labels, anchors,
                images_per_step=None):
    """preds['boxes']=[B,A,4] (deltas, bf16 ok), preds['labels']=[B,A,C]
    (logits, bf16 ok), targets boxes [B,G,4] / labels [B,G], anchor [B,A,4].
    Returns dict with scalar 'class' / 'box' losses."""
    B, A, C = pred_labels.shape
    G = target_boxes.shape[1]
    f32 = jnp.float32

    if images_per_step is None:
        # Batch several images per grid step (amortize ~0.35us/step) while
        # keeping >= 2 steps so both v7x TensorCores get work (parallel axis).
        images_per_step = max(1, min(8, B // 2))
    Bt = int(images_per_step)
    nsteps = -(-B // Bt)
    B_pad = nsteps * Bt

    vmem_limit = _vmem_budget()
    # Rough live-f32-columns-per-anchor estimate -> largest A tile that fits.
    live_cols = 3 * C + 2 * G + 48
    a_tile_max = max(256, min(32768, (vmem_limit // 2) // (4 * live_cols * Bt)))
    n_a = max(1, -(-A // a_tile_max))
    A_tile = _round_up(-(-A // n_a), 32)      # bf16 sublane packing wants %32
    A_pad = n_a * A_tile
    K = C + 4

    def prep_b(x):
        if B_pad != B:
            pad = [(0, B_pad - B)] + [(0, 0)] * (x.ndim - 1)
            x = jnp.pad(x, pad, mode='edge')  # replicate a real image; sliced off later
        return x

    def prep_a(x):
        # TODO(synk): production callers should supply A as a multiple of the
        # tile so this pad (an HBM copy of the big tensors) never triggers.
        if A_pad != A:
            x = jnp.pad(x, ((0, 0), (0, A_pad - A), (0, 0)))
        return x

    # Native layouts, no big transposes.  Logits / deltas bf16 (upcast in-kernel);
    # anchors kept f32 so IoU threshold decisions stay exact.
    an_p = prep_b(prep_a(anchors.astype(f32)))                      # [B_pad, A_pad, 4]
    db_p = prep_b(prep_a(pred_boxes.astype(jnp.bfloat16)))          # [B_pad, A_pad, 4]
    dl_p = prep_b(prep_a(pred_labels.astype(jnp.bfloat16)))         # [B_pad, A_pad, C]

    # Tiny gt-side tensors (host transposes here are negligible).
    tbr = prep_b(jnp.transpose(target_boxes.astype(f32), (0, 2, 1)))        # [B_pad,4,G]
    onehot = jax.nn.one_hot(target_labels, C, dtype=f32)                    # [B,G,C]
    gtm = prep_b(jnp.concatenate([onehot, target_boxes.astype(f32)],
                                 axis=2))                                   # [B_pad,G,C+4]

    def anchor_valid(a_idx):
        row = lax.broadcasted_iota(jnp.int32, (A_tile, 1), 0) + a_idx * A_tile
        return (row < A).astype(f32)                      # [At, 1]

    # ------------- pass 1: highest IoU per gt over ALL anchors ---------------
    def hq_kernel(tbr_ref, an_ref, hq_ref):
        a_idx = pl.program_id(1)
        iou = _iou_vs_anchors(tbr_ref[...], an_ref[...], anchor_valid(a_idx))
        part = jnp.max(iou, axis=1, keepdims=True)        # [Bt, 1, G]

        @pl.when(a_idx == 0)
        def _():
            hq_ref[...] = jnp.zeros_like(hq_ref)          # IoU >= 0
        hq_ref[0] = jnp.maximum(hq_ref[0], part)

    hq = pl.pallas_call(
        hq_kernel,
        out_shape=jax.ShapeDtypeStruct((nsteps, Bt, 1, G), f32),
        grid_spec=pltpu.PrefetchScalarGridSpec(
            num_scalar_prefetch=0,
            grid=(nsteps, n_a),
            in_specs=[
                pl.BlockSpec((Bt, 4, G), lambda b, a: (b, 0, 0)),
                pl.BlockSpec((Bt, A_tile, 4), lambda b, a: (b, a, 0)),
            ],
            out_specs=pl.BlockSpec((1, Bt, 1, G), lambda b, a: (b, 0, 0, 0)),
        ),
        compiler_params=pltpu.CompilerParams(
            dimension_semantics=("parallel", "arbitrary"),
            vmem_limit_bytes=vmem_limit,
        ),
    )(tbr, an_p)

    # ------------- pass 2: matcher + focal class loss + box loss -------------
    def loss_kernel(tbr_ref, gtm_ref, hq_ref, an_ref, dl_ref, db_ref, out_ref):
        a_idx = pl.program_id(1)
        tbr_t = tbr_ref[...]                              # [Bt, 4, G]
        gtm_t = gtm_ref[...]                              # [Bt, G, C+4]
        hq2 = hq_ref[0]                                   # [Bt, 1, G]
        an = an_ref[...]                                  # [Bt, At, 4]  f32
        x = dl_ref[...].astype(f32)                       # [Bt, At, C]
        db = db_ref[...].astype(f32)                      # [Bt, At, 4]

        avalid = anchor_valid(a_idx)                      # [At, 1]
        iou = _iou_vs_anchors(tbr_t, an, avalid)          # [Bt, At, G]

        # -- Matcher (torchvision semantics, allow_low_quality_matches=True) --
        matched_vals = jnp.max(iou, axis=2, keepdims=True)          # [Bt,At,1]
        g_iota = lax.broadcasted_iota(jnp.int32, iou.shape, 2)
        cand = jnp.where(iou == matched_vals, g_iota, jnp.int32(G))
        matches0 = jnp.min(cand, axis=2, keepdims=True)   # first argmax
        # TODO(synk): fuse matched_vals+matches0 into one packed-key reduction
        # if the XLU becomes the secondary bottleneck at production G.
        below = matched_vals < BG_IOU_THRESH
        between = jnp.logical_and(matched_vals >= BG_IOU_THRESH,
                                  matched_vals < FG_IOU_THRESH)
        matches = jnp.where(below, jnp.int32(-1),
                            jnp.where(between, jnp.int32(-2), matches0))
        # restore anchors that are the best match of some gt (A-global max).
        low_quality = jnp.max(jnp.where(iou == hq2, 1.0, 0.0),
                              axis=2, keepdims=True) > 0.5
        matches = jnp.where(low_quality, matches0, matches)
        # TODO(synk): ragged / degenerate gt rows need a gt-valid mask here.

        fg = matches >= 0                                  # [Bt, At, 1]
        fg_f = fg.astype(f32) * avalid
        valid_f = (matches != -2).astype(f32) * avalid

        # -- MXU gather of per-anchor gt targets: [one-hot classes ; gt box] --
        Mf = jnp.where(jnp.logical_and(g_iota == matches, fg), 1.0, 0.0)
        gathered = jnp.einsum('bag,bgk->bak', Mf, gtm_t,
                              preferred_element_type=f32)  # [Bt, At, C+4]
        t = gathered[:, :, :C]                             # one-hot class target
        m_gx1 = gathered[:, :, C + 0:C + 1]
        m_gy1 = gathered[:, :, C + 1:C + 2]
        m_gx2 = gathered[:, :, C + 2:C + 3]
        m_gy2 = gathered[:, :, C + 3:C + 4]

        # -- sigmoid focal loss: one exp, sigmoid derived from it (fewer EUP) --
        # TODO(synk): chunk over C (lax.fori_loop) at production C/A_tile to
        # bound the number of live [Bt,At,C] temps.
        e = jnp.exp(-jnp.abs(x))
        ce = jnp.maximum(x, 0.0) - x * t + jnp.log1p(e)
        inv1pe = pl.reciprocal(1.0 + e, approx=True)
        p = jnp.where(x >= 0.0, inv1pe, e * inv1pe)        # sigmoid(x)
        p_t = p * t + (1.0 - p) * (1.0 - t)
        alpha_t = FOCAL_ALPHA * t + (1.0 - FOCAL_ALPHA) * (1.0 - t)
        focal = alpha_t * ce * (1.0 - p_t) * (1.0 - p_t)   # [Bt, At, C]

        # reduce over C on the MXU, then mask per-anchor (A mults, not A*C).
        ones_c = jnp.ones((Bt, C, 1), f32)
        focal_pa = jnp.einsum('bac,bco->bao', focal, ones_c,
                              preferred_element_type=f32)  # [Bt, At, 1]

        # -- box loss --
        # TODO(synk): exact box_criterion / BoxCoder (ciou/diou/giou variants)
        # not given in the reference; Faster-RCNN-style encode + L1 ('l1' branch).
        ax1 = an[:, :, 0:1]; ay1 = an[:, :, 1:2]
        ax2 = an[:, :, 2:3]; ay2 = an[:, :, 3:4]
        ex_w = jnp.maximum(ax2 - ax1, 1e-6)
        ex_h = jnp.maximum(ay2 - ay1, 1e-6)
        inv_ex_w = pl.reciprocal(ex_w, approx=True)
        inv_ex_h = pl.reciprocal(ex_h, approx=True)
        ex_cx = ax1 + 0.5 * ex_w
        ex_cy = ay1 + 0.5 * ex_h
        g_w = m_gx2 - m_gx1
        g_h = m_gy2 - m_gy1
        g_cx = m_gx1 + 0.5 * g_w
        g_cy = m_gy1 + 0.5 * g_h
        safe_w = jnp.maximum(jnp.where(fg, g_w, ex_w), 1e-6)   # keep log() finite
        safe_h = jnp.maximum(jnp.where(fg, g_h, ex_h), 1e-6)
        tdx = (g_cx - ex_cx) * inv_ex_w
        tdy = (g_cy - ex_cy) * inv_ex_h
        tdw = jnp.log(safe_w * inv_ex_w)
        tdh = jnp.log(safe_h * inv_ex_h)
        l1 = (jnp.abs(tdx - db[:, :, 0:1]) + jnp.abs(tdy - db[:, :, 1:2]) +
              jnp.abs(tdw - db[:, :, 2:3]) + jnp.abs(tdh - db[:, :, 3:4]))  # [Bt,At,1]

        # -- A-axis reductions as one small MXU matmul: [cls, box, num_fg] --
        cols = jnp.concatenate([focal_pa * valid_f, l1 * fg_f, fg_f], axis=2)
        ones_a = jnp.ones((Bt, 1, A_tile), f32)
        red = jnp.einsum('boa,bak->bok', ones_a, cols,
                         preferred_element_type=f32)       # [Bt, 1, 3]

        # pack partial sums into the lane-dense per-step output tile.
        lane = lax.broadcasted_iota(jnp.int32, (Bt, 128), 1)
        tile = jnp.where(lane == 0, red[:, :, 0],
                         jnp.where(lane == 1, red[:, :, 1],
                                   jnp.where(lane == 2, red[:, :, 2], 0.0)))

        @pl.when(a_idx == 0)
        def _():
            out_ref[...] = jnp.zeros_like(out_ref)
        out_ref[0] = out_ref[0] + tile

    out = pl.pallas_call(
        loss_kernel,
        out_shape=jax.ShapeDtypeStruct((nsteps, Bt, 128), f32),
        grid_spec=pltpu.PrefetchScalarGridSpec(
            num_scalar_prefetch=0,
            grid=(nsteps, n_a),
            in_specs=[
                pl.BlockSpec((Bt, 4, G), lambda b, a: (b, 0, 0)),
                pl.BlockSpec((Bt, G, K), lambda b, a: (b, 0, 0)),
                pl.BlockSpec((1, Bt, 1, G), lambda b, a: (b, 0, 0, 0)),
                pl.BlockSpec((Bt, A_tile, 4), lambda b, a: (b, a, 0)),
                pl.BlockSpec((Bt, A_tile, C), lambda b, a: (b, a, 0)),
                pl.BlockSpec((Bt, A_tile, 4), lambda b, a: (b, a, 0)),
            ],
            out_specs=pl.BlockSpec((1, Bt, 128), lambda b, a: (b, 0, 0)),
        ),
        compiler_params=pltpu.CompilerParams(
            dimension_semantics=("parallel", "arbitrary"),
            vmem_limit_bytes=vmem_limit,
        ),
    )(tbr, gtm, hq, an_p, dl_p, db_p)

    sums = out.reshape(nsteps * Bt, 128)[:B]
    cls_sum = sums[:, 0]
    box_sum = sums[:, 1]
    num_fg = jnp.maximum(sums[:, 2], 1.0)     # exact per-image normalization
    class_per_img = cls_sum / num_fg
    box_per_img = box_sum / num_fg
    # TODO(synk): the PyTorch "skip images with zero gt boxes" is data-dependent;
    # every image in this setup has G > 0 boxes so the divisor equals B.
    n = jnp.float32(max(1, B))
    return {"class": jnp.sum(class_per_img) / n,
            "box": jnp.sum(box_per_img) / n}


if __name__ == "__main__":
    key = jax.random.PRNGKey(0)
    B, A, C, G = 2, 128, 8, 8
    k1, k2, k3, k4, k5 = jax.random.split(key, 5)

    def rand_boxes(k, n):
        ka, kb = jax.random.split(k)
        xy1 = jax.random.uniform(ka, (B, n, 2), minval=0.0, maxval=12.0)
        wh = jax.random.uniform(kb, (B, n, 2), minval=1.0, maxval=4.0)
        return jnp.concatenate([xy1, xy1 + wh], axis=-1).astype(jnp.float32)

    anchors = rand_boxes(k1, A)                                            # [B, A, 4]
    target_boxes = rand_boxes(k2, G)                                       # [B, G, 4]
    target_labels = jax.random.randint(k3, (B, G), 0, C, dtype=jnp.int32)  # [B, G]
    # Producer-side bf16 (a real detection head can emit bf16 directly; avoids
    # an extra HBM cast pass in front of the kernel).
    pred_labels = jax.random.normal(k4, (B, A, C),
                                    dtype=jnp.float32).astype(jnp.bfloat16)   # logits
    pred_boxes = (0.1 * jax.random.normal(k5, (B, A, 4),
                                          dtype=jnp.float32)).astype(jnp.bfloat16)

    loss = yolov4_loss(pred_boxes, pred_labels, target_boxes, target_labels, anchors)
    jax.block_until_ready(loss)
    assert jnp.isfinite(loss["class"]) and jnp.isfinite(loss["box"])
    print("KERNEL_OK")
</pallas_src>

<mosaic_0001>
module attributes {stable_mosaic.version = 11 : i64} {
  func.func @hq_kernel(%arg0: i32, %arg1: i32, %arg2: memref<1x4x8xf32, #tpu.memory_space<vmem>>, %arg3: memref<1x128x4xf32, #tpu.memory_space<vmem>>, %arg4: memref<1x1x1x8xf32, #tpu.memory_space<vmem>>) attributes {dimension_semantics = [#tpu.dimension_semantics<parallel>, #tpu.dimension_semantics<arbitrary>], iteration_bounds = array<i64: 2, 1>, scalar_prefetch = 0 : i64, scratch_operands = 0 : i64, tpu.core_type = #tpu.core_type<tc>, window_params = [{transform_indices = @transform_0, window_bounds = array<i64: 1, 4, 8>}, {transform_indices = @transform_1, window_bounds = array<i64: 1, 128, 4>}, {transform_indices = @transform_2, window_bounds = array<i64: 1, 1, 1, 8>}]} {
    %c0 = arith.constant 0 : index
    %c0_0 = arith.constant 0 : index
    %c0_1 = arith.constant 0 : index
    %0 = vector.load %arg2[%c0, %c0_0, %c0_1] : memref<1x4x8xf32, #tpu.memory_space<vmem>>, vector<1x4x8xf32>
    %c0_2 = arith.constant 0 : index
    %c0_3 = arith.constant 0 : index
    %c0_4 = arith.constant 0 : index
    %1 = vector.load %arg3[%c0_2, %c0_3, %c0_4] : memref<1x128x4xf32, #tpu.memory_space<vmem>>, vector<1x128x4xf32>
    %2 = tpu.iota {dimensions = array<i32: 0>} : vector<128x1xi32>
    %c128_i32 = arith.constant 128 : i32
    %3 = arith.muli %arg1, %c128_i32 : i32
    %4 = vector.broadcast %3 : i32 to vector<128x1xi32>
    %5 = arith.addi %2, %4 : vector<128x1xi32>
    %c128_i32_5 = arith.constant 128 : i32
    %6 = vector.broadcast %c128_i32_5 : i32 to vector<128x1xi32>
    %7 = arith.cmpi slt, %5, %6 : vector<128x1xi32>
    %8 = arith.extui %7 : vector<128x1xi1> to vector<128x1xi32>
    %9 = arith.sitofp %8 : vector<128x1xi32> to vector<128x1xf32>
    %10 = vector.extract_strided_slice %0 {offsets = [0, 0, 0], sizes = [1, 1, 8], strides = [1, 1, 1]} : vector<1x4x8xf32> to vector<1x1x8xf32>
    %11 = vector.extract_strided_slice %0 {offsets = [0, 1, 0], sizes = [1, 1, 8], strides = [1, 1, 1]} : vector<1x4x8xf32> to vector<1x1x8xf32>
    %12 = vector.extract_strided_slice %0 {offsets = [0, 2, 0], sizes = [1, 1, 8], strides = [1, 1, 1]} : vector<1x4x8xf32> to vector<1x1x8xf32>
    %13 = vector.extract_strided_slice %0 {offsets = [0, 3, 0], sizes = [1, 1, 8], strides = [1, 1, 1]} : vector<1x4x8xf32> to vector<1x1x8xf32>
    %14 = vector.extract_strided_slice %1 {offsets = [0, 0, 0], sizes = [1, 128, 1], strides = [1, 1, 1]} : vector<1x128x4xf32> to vector<1x128x1xf32>
    %15 = vector.extract_strided_slice %1 {offsets = [0, 0, 1], sizes = [1, 128, 1], strides = [1, 1, 1]} : vector<1x128x4xf32> to vector<1x128x1xf32>
    %16 = vector.extract_strided_slice %1 {offsets = [0, 0, 2], sizes = [1, 128, 1], strides = [1, 1, 1]} : vector<1x128x4xf32> to vector<1x128x1xf32>
    %17 = vector.extract_strided_slice %1 {offsets = [0, 0, 3], sizes = [1, 128, 1], strides = [1, 1, 1]} : vector<1x128x4xf32> to vector<1x128x1xf32>
    %18 = arith.subf %12, %10 : vector<1x1x8xf32>
    %19 = arith.subf %13, %11 : vector<1x1x8xf32>
    %20 = arith.mulf %18, %19 : vector<1x1x8xf32>
    %21 = arith.subf %16, %14 : vector<1x128x1xf32>
    %22 = arith.subf %17, %15 : vector<1x128x1xf32>
    %23 = arith.mulf %21, %22 : vector<1x128x1xf32>
    %24 = vector.broadcast %16 : vector<1x128x1xf32> to vector<1x128x8xf32>
    %25 = vector.broadcast %12 : vector<1x1x8xf32> to vector<1x128x8xf32>
    %26 = arith.minimumf %24, %25 : vector<1x128x8xf32>
    %27 = vector.broadcast %14 : vector<1x128x1xf32> to vector<1x128x8xf32>
    %28 = vector.broadcast %10 : vector<1x1x8xf32> to vector<1x128x8xf32>
    %29 = arith.maximumf %27, %28 : vector<1x128x8xf32>
    %30 = arith.subf %26, %29 : vector<1x128x8xf32>
    %cst = arith.constant 0.000000e+00 : f32
    %31 = vector.broadcast %cst : f32 to vector<1x128x8xf32>
    %32 = arith.maximumf %30, %31 : vector<1x128x8xf32>
    %33 = vector.broadcast %17 : vector<1x128x1xf32> to vector<1x128x8xf32>
    %34 = vector.broadcast %13 : vector<1x1x8xf32> to vector<1x128x8xf32>
    %35 = arith.minimumf %33, %34 : vector<1x128x8xf32>
    %36 = vector.broadcast %15 : vector<1x128x1xf32> to vector<1x128x8xf32>
    %37 = vector.broadcast %11 : vector<1x1x8xf32> to vector<1x128x8xf32>
    %38 = arith.maximumf %36, %37 : vector<1x128x8xf32>
    %39 = arith.subf %35, %38 : vector<1x128x8xf32>
    %cst_6 = arith.constant 0.000000e+00 : f32
    %40 = vector.broadcast %cst_6 : f32 to vector<1x128x8xf32>
    %41 = arith.maximumf %39, %40 : vector<1x128x8xf32>
    %42 = arith.mulf %32, %41 : vector<1x128x8xf32>
    %43 = vector.broadcast %23 : vector<1x128x1xf32> to vector<1x128x8xf32>
    %44 = vector.broadcast %20 : vector<1x1x8xf32> to vector<1x128x8xf32>
    %45 = arith.addf %43, %44 : vector<1x128x8xf32>
    %46 = arith.subf %45, %42 : vector<1x128x8xf32>
    %cst_7 = arith.constant 9.99999971E-10 : f32
    %47 = vector.broadcast %cst_7 : f32 to vector<1x128x8xf32>
    %48 = arith.maximumf %46, %47 : vector<1x128x8xf32>
    %49 = arith.divf %42, %48 : vector<1x128x8xf32>
    %50 = vector.shape_cast %9 : vector<128x1xf32> to vector<1x128x1xf32>
    %51 = vector.broadcast %50 : vector<1x128x1xf32> to vector<1x128x8xf32>
    %52 = arith.mulf %49, %51 : vector<1x128x8xf32>
    %cst_8 = arith.constant dense<0xFF800000> : vector<1x8xf32>
    %53 = vector.multi_reduction <maximumf>, %52, %cst_8 [1] : vector<1x128x8xf32> to vector<1x8xf32>
    %54 = vector.shape_cast %53 : vector<1x8xf32> to vector<1x1x8xf32>
    %c0_i32 = arith.constant 0 : i32
    %55 = arith.cmpi eq, %arg1, %c0_i32 : i32
    %56 = arith.extui %55 : i1 to i32
    %c0_i32_9 = arith.constant 0 : i32
    %57 = arith.cmpi ne, %56, %c0_i32_9 : i32
    scf.if %57 {
      %cst_18 = arith.constant 0.000000e+00 : f32
      %64 = vector.broadcast %cst_18 : f32 to vector<1x1x1x8xf32>
      %c0_19 = arith.constant 0 : index
      %c0_20 = arith.constant 0 : index
      %c0_21 = arith.constant 0 : index
      %c0_22 = arith.constant 0 : index
      %65 = vector.load %arg4[%c0_19, %c0_20, %c0_21, %c0_22] : memref<1x1x1x8xf32, #tpu.memory_space<vmem>>, vector<1x1x1x8xf32>
      tpu.vector_store %arg4[%c0_19, %c0_20, %c0_21, %c0_22], %64 {strides = array<i32>} : memref<1x1x1x8xf32, #tpu.memory_space<vmem>>, vector<1x1x1x8xf32>,
    } else {
    }
    %c0_10 = arith.constant 0 : index
    %c0_11 = arith.constant 0 : index
    %c0_12 = arith.constant 0 : index
    %c0_13 = arith.constant 0 : index
    %58 = vector.load %arg4[%c0_10, %c0_11, %c0_12, %c0_13] : memref<1x1x1x8xf32, #tpu.memory_space<vmem>>, vector<1x1x1x8xf32>
    %59 = vector.shape_cast %58 : vector<1x1x1x8xf32> to vector<1x1x8xf32>
    %60 = arith.maximumf %59, %54 : vector<1x1x8xf32>
    %c0_14 = arith.constant 0 : index
    %c0_15 = arith.constant 0 : index
    %c0_16 = arith.constant 0 : index
    %c0_17 = arith.constant 0 : index
    %61 = vector.load %arg4[%c0_14, %c0_15, %c0_16, %c0_17] : memref<1x1x1x8xf32, #tpu.memory_space<vmem>>, vector<1x1x1x8xf32>
    %62 = vector.shape_cast %61 : vector<1x1x1x8xf32> to vector<1x1x8xf32>
    %63 = vector.shape_cast %60 : vector<1x1x8xf32> to vector<1x1x1x8xf32>
    tpu.vector_store %arg4[%c0_14, %c0_15, %c0_16, %c0_17], %63 {strides = array<i32>} : memref<1x1x1x8xf32, #tpu.memory_space<vmem>>, vector<1x1x1x8xf32>,
    return
  }
  func.func @transform_0(%arg0: i32, %arg1: i32) -> (i32, i32, i32) {
    %c0_i32 = arith.constant 0 : i32
    %c0_i32_0 = arith.constant 0 : i32
    %c0_i32_1 = arith.constant 0 : i32
    return %arg0, %c0_i32, %c0_i32_0 : i32, i32, i32
  }
  func.func @transform_1(%arg0: i32, %arg1: i32) -> (i32, i32, i32) {
    %c0_i32 = arith.constant 0 : i32
    %c0_i32_0 = arith.constant 0 : i32
    return %arg0, %arg1, %c0_i32 : i32, i32, i32
  }
  func.func @transform_2(%arg0: i32, %arg1: i32) -> (i32, i32, i32, i32) {
    %c0_i32 = arith.constant 0 : i32
    %c0_i32_0 = arith.constant 0 : i32
    %c0_i32_1 = arith.constant 0 : i32
    %c0_i32_2 = arith.constant 0 : i32
    return %arg0, %c0_i32, %c0_i32_0, %c0_i32_1 : i32, i32, i32, i32
  }
}

</mosaic_0001>

<llo_original>
// kernel: tpu_custom_call.1
$region0: #{tpu_custom_call.1}
  #allocation0 [shape = 'u32[]', space=smem, size = 0x4, offset = 0x4, fixed_abs, tag = 'smem constant byte address 0x4 - core index']
  #allocation1 [shape = 'u32[72,128]{1,0:T(1,128)}', space=vmem, size = 0x9000, scoped, tag = 'internal scratch']
  %s0 = inlined_call_operand.vmem [shape: f32[2,4,8], index: 0, kind: input, shape index: {}]
  %s1 = inlined_call_operand.vmem [shape: f32[2,128,4], index: 1, kind: input, shape index: {}]
  %s2 = inlined_call_operand.hbm [shape: f32[2,1,1,8], index: 2, kind: output, shape index: {}]
  %s3 = sld [smem:[#allocation0]]
  $region45: #{tpu_custom_call.1} parent=0
    _
  %s5 = ssub.s32 1, %s3
  %s6 = scalar_select 0, %s5, %s3
  $region1: #{tpu_custom_call.1} parent=0
    #allocation2 [shape = 'u8[1024]{0}', space=vmem, size = 0x400, scoped, tag = 'output window, operand 0']
    #allocation3 [shape = 's32[2]{0}', space=sflag, size = 0x8, scoped, tag = 'scoped memory for tpu_custom_call.1']
    %7 = vsyncpa [#allocation3], 0
    %s8 = scalar_lea.sflag [#allocation3], 1
    %9 = vsyncpa %s8, 0
    loop: start=0, step=1, limit=4
    $region2: #{tpu_custom_call.1} parent=1 // loop_pre_header
      _
    $region3: #{tpu_custom_call.1} parent=1 // loop_header
      %s11 = sphi 0, %s15
      %p12 = scmp.ge.s32.totalorder %s11, 4
      %s18 = sphi 0, %s30
      %s19 = sphi 0, %s26
      %s20 = sphi 0, %s18
      %s21 = sphi 0, %s19
      %s22 = sphi 0, %s20
      %s23 = sphi 0, %s21
      %s33 = sphi 0, %s35
      %s36 = sphi 0, %s33
      %s37 = sphi 0, %s36
      %s53 = sphi 0, %s37
      %s61 = sphi 0, %s63
      %s64 = sphi 0, %s61
      %s65 = sphi 0, %s64
      %s81 = sphi 0, %s65
      %s87 = sphi 0, %s89
      %s90 = sphi 0, %s87
      %s91 = sphi 0, %s90
      %s107 = sphi 0, %s91
    $region4: #{tpu_custom_call.1} parent=1 // loop_header_branch
      %14 = sbr.rel (%p12) target = $region8
    $region5: #{tpu_custom_call.1} parent=1 // loop_body
      %s16 = ssub.s32 %s11, 1
      %s17 = ssub.s32 %s11, 2
      %s24 = sadd.s32 1, %s19
      %p25 = scmp.ge.s32.totalorder %s24, 1
      %s26 = scalar_select %p25, 0, %s24
      %s27 = sadd.s32 1, %s18
      %s28 = scalar_select %p25, %s27, %s18
      %p29 = scmp.ge.s32.totalorder %s28, 2
      %s30 = scalar_select %p29, 0, %s28
      %s31 = ssub.s32 %s18, %s30
      %p32 = scmp.eq.s32.totalorder %s31, 0
      %s34 = sadd.s32 %s33, 1
      %s35 = scalar_select %p32, %s33, %s34
      %p38 = pneg %p32
      %p39 = scmp.eq.s32.totalorder %s11, 1
      %p40 = por %p38, %p39
      %p41 = scmp.ne.s32.totalorder %s33, %s36
      %p42 = scmp.eq.s32.totalorder %s11, 0
      %p43 = por %p41, %p42
      %p44 = scmp.ne.s32.totalorder %s33, %s36
      %p45 = scmp.eq.s32.totalorder %s16, 1
      %p46 = por %p44, %p45
      %p47 = scmp.ne.s32.totalorder %s36, %s37
      %p48 = scmp.eq.s32.totalorder %s16, 0
      %p49 = por %p47, %p48
      %p50 = scmp.ne.s32.totalorder %s36, %s37
      %p51 = scmp.eq.s32.totalorder %s17, 1
      %p52 = por %p50, %p51
      %p54 = scmp.ne.s32.totalorder %s37, %s53
      %p55 = scmp.eq.s32.totalorder %s17, 0
      %p56 = por %p54, %p55
      %s57 = ssub.s32 %s18, %s30
      %s58 = ssub.s32 %s19, %s26
      %s59 = sor.u32 %s57, %s58
      %p60 = scmp.eq.s32.totalorder %s59, 0
      %s62 = sadd.s32 %s61, 1
      %s63 = scalar_select %p60, %s61, %s62
      %p66 = pneg %p60
      %p67 = scmp.eq.s32.totalorder %s11, 1
      %p68 = por %p66, %p67
      %p69 = scmp.ne.s32.totalorder %s61, %s64
      %p70 = scmp.eq.s32.totalorder %s11, 0
      %p71 = por %p69, %p70
      %p72 = scmp.ne.s32.totalorder %s61, %s64
      %p73 = scmp.eq.s32.totalorder %s16, 1
      %p74 = por %p72, %p73
      %p75 = scmp.ne.s32.totalorder %s64, %s65
      %p76 = scmp.eq.s32.totalorder %s16, 0
      %p77 = por %p75, %p76
      %p78 = scmp.ne.s32.totalorder %s64, %s65
      %p79 = scmp.eq.s32.totalorder %s17, 1
      %p80 = por %p78, %p79
      %p82 = scmp.ne.s32.totalorder %s65, %s81
      %p83 = scmp.eq.s32.totalorder %s17, 0
      %p84 = por %p82, %p83
      %s85 = ssub.s32 %s18, %s30
      %p86 = scmp.eq.s32.totalorder %s85, 0
      %s88 = sadd.s32 %s87, 1
      %s89 = scalar_select %p86, %s87, %s88
      %p92 = pneg %p86
      %p93 = scmp.eq.s32.totalorder %s11, 1
      %p94 = por %p92, %p93
      %p95 = scmp.ne.s32.totalorder %s87, %s90
      %p96 = scmp.eq.s32.totalorder %s11, 0
      %p97 = por %p95, %p96
      %p98 = scmp.ne.s32.totalorder %s87, %s90
      %p99 = scmp.eq.s32.totalorder %s16, 1
      %p100 = por %p98, %p99
      %p101 = scmp.ne.s32.totalorder %s90, %s91
      %p102 = scmp.eq.s32.totalorder %s16, 0
      %p103 = por %p101, %p102
      %p104 = scmp.ne.s32.totalorder %s90, %s91
      %p105 = scmp.eq.s32.totalorder %s17, 1
      %p106 = por %p104, %p105
      %p108 = scmp.ne.s32.totalorder %s91, %s107
      %p109 = scmp.eq.s32.totalorder %s17, 0
      %p110 = por %p108, %p109
      %p111 = scmp.le.s32.totalorder 1, %s11
      %p112 = scmp.lt.s32.totalorder %s11, 3
      %p113 = pnand %p111, %p112
      %p114 = pneg %p113
      // Predicated region
      $region9: #{tpu_custom_call.1} parent=5 // pred_check
        _
      $region10: #{tpu_custom_call.1} parent=5 // pred_check_branch
        %116 = sbr.rel (%p113) target = $region12
      $region11: #{tpu_custom_call.1} parent=5 // pred_region
        %s117 = ssub.s32 %s11, 1
      $region12: #{tpu_custom_call.1} parent=5 // pred_fallthru
        _
      %p118 = scmp.lt.s32.totalorder %s11, 2
      // Predicated region
      $region13: #{tpu_custom_call.1} parent=5 // pred_check
        %p119 = pneg %p118
      $region14: #{tpu_custom_call.1} parent=5 // pred_check_branch
        %121 = sbr.rel (%p119) target = $region16
      $region15: #{tpu_custom_call.1} parent=5 // pred_region
        // Predicated region
        $region17: #{tpu_custom_call.1} parent=15 // pred_check
          %p122 = pneg %p43
        $region18: #{tpu_custom_call.1} parent=15 // pred_check_branch
          %124 = sbr.rel (%p122) target = $region20
        $region19: #{tpu_custom_call.1} parent=15 // pred_region
          %p125 = scmp.lt.s32.totalorder %s18, 1
          %s126 = scalar_select %p125, %s18, 1
          %s127 = smul.addr %s126, 4
          %s128 = scalar_lea.vmem %s0, %s127
        $region20: #{tpu_custom_call.1} parent=15 // pred_fallthru
          _
        // Predicated region
        $region21: #{tpu_custom_call.1} parent=15 // pred_check
          %p129 = pneg %p71
        $region22: #{tpu_custom_call.1} parent=15 // pred_check_branch
          %131 = sbr.rel (%p129) target = $region24
        $region23: #{tpu_custom_call.1} parent=15 // pred_region
          %s132 = smul.u32 16, %s19
          %p133 = scmp.lt.s32.totalorder %s18, 1
          %s134 = scalar_select %p133, %s18, 1
          %p135 = scmp.lt.s32.totalorder %s132, 15
          %s136 = scalar_select %p135, %s132, 15
          %s137 = smul.addr %s134, 16
          %s138 = sadd.s32 %s136, %s137
          %s139 = smul.addr %s138, 8
          %s140 = scalar_lea.vmem %s1, %s139
          %s141 = smul.u32 16, %s19
        $region24: #{tpu_custom_call.1} parent=15 // pred_fallthru
          _
      $region16: #{tpu_custom_call.1} parent=5 // pred_fallthru
        _
      %p142 = scmp.le.s32.totalorder 1, %s11
      %p143 = scmp.lt.s32.totalorder %s11, 3
      %p144 = pnand %p142, %p143
      %p145 = pneg %p144
      // Predicated region
      $region25: #{tpu_custom_call.1} parent=5 // pred_check
        _
      $region26: #{tpu_custom_call.1} parent=5 // pred_check_branch
        %147 = sbr.rel (%p144) target = $region28
      $region27: #{tpu_custom_call.1} parent=5 // pred_region
        %s148 = ssub.s32 %s11, 1
        %p149 = scmp.lt.s32.totalorder %s20, 1
        %s150 = scalar_select %p149, %s20, 1
        %s151 = smul.addr %s150, 4
        %s152 = scalar_lea.vmem %s0, %s151
        %p153 = pneg %p49
        %p154 = pneg %p46
        %s155 = smul.u32 16, %s21
        %p156 = scmp.lt.s32.totalorder %s20, 1
        %s157 = scalar_select %p156, %s20, 1
        %p158 = scmp.lt.s32.totalorder %s155, 15
        %s159 = scalar_select %p158, %s155, 15
        %s160 = smul.addr %s157, 16
        %s161 = sadd.s32 %s159, %s160
        %s162 = smul.addr %s161, 8
        %s163 = scalar_lea.vmem %s1, %s162
        %p164 = pneg %p77
        %p165 = pneg %p74
        %p166 = pneg %p103
        %p167 = pneg %p100
        %s168 = sand.u32 %s90, 1
        %s169 = scalar_lea.sflag [#allocation3], %s168
        %s170 = sand.u32 %s90, 1
        %s171 = scalar_lea.vmem [#allocation2], %s170
        %p172 = scmp.lt.s32.totalorder %s20, 1
        %s173 = scalar_select %p172, %s20, 1
        %s174 = smul.addr %s173, 4
        %s175 = scalar_lea.vmem %s0, %s174
        %s176 = smul.u32 16, %s21
        %p177 = scmp.lt.s32.totalorder %s20, 1
        %s178 = scalar_select %p177, %s20, 1
        %p179 = scmp.lt.s32.totalorder %s176, 15
        %s180 = scalar_select %p179, %s176, 15
        %s181 = smul.addr %s178, 16
        %s182 = sadd.s32 %s180, %s181
        %s183 = smul.addr %s182, 8
        %s184 = scalar_lea.vmem %s1, %s183
        %s185 = smul.u32 16, %s21
        %v186 = vld [vmem:[%s175] sm:$0xf]
        %v187 = vld [vmem:[%s184] sm:$0xff]
        %v188 = vld [vmem:[%s184 + $0x8] sm:$0xff]
        %v189 = vld [vmem:[%s184 + $0x10] sm:$0xff]
        %v190 = vld [vmem:[%s184 + $0x18] sm:$0xff]
        %v191 = vld [vmem:[%s184 + $0x20] sm:$0xff]
        %v192 = vld [vmem:[%s184 + $0x28] sm:$0xff]
        %v193 = vld [vmem:[%s184 + $0x30] sm:$0xff]
        %v194 = vld [vmem:[%s184 + $0x38] sm:$0xff]
        %v195 = vld [vmem:[%s184 + $0x40] sm:$0xff]
        %v196 = vld [vmem:[%s184 + $0x48] sm:$0xff]
        %v197 = vld [vmem:[%s184 + $0x50] sm:$0xff]
        %v198 = vld [vmem:[%s184 + $0x58] sm:$0xff]
        %v199 = vld [vmem:[%s184 + $0x60] sm:$0xff]
        %v200 = vld [vmem:[%s184 + $0x68] sm:$0xff]
        %v201 = vld [vmem:[%s184 + $0x70] sm:$0xff]
        %v202 = vld [vmem:[%s184 + $0x78] sm:$0xff]
        %v203 = vlaneseq
        %v204 = vshrl.u32 %v203, 7
        %v205 = vadd.s32 %v204, 8
        %v206 = vadd.s32 %v204, 16
        %v207 = vadd.s32 %v204, 24
        %v208 = vadd.s32 %v204, 32
        %v209 = vadd.s32 %v204, 40
        %v210 = vadd.s32 %v204, 48
        %v211 = vadd.s32 %v204, 56
        %v212 = vadd.s32 %v204, 64
        %v213 = vadd.s32 %v204, 72
        %v214 = vadd.s32 %v204, 80
        %v215 = vadd.s32 %v204, 88
        %v216 = vadd.s32 %v204, 96
        %v217 = vadd.s32 %v204, 104
        %v218 = vadd.s32 %v204, 112
        %v219 = vadd.s32 %v204, 120
        %s220 = smul.u32 %s21, 128
        %v221 = vstv %s220
        %v222 = vadd.s32 %v204, %v221
        %v223 = vadd.s32 %v205, %v221
        %v224 = vadd.s32 %v206, %v221
        %v225 = vadd.s32 %v207, %v221
        %v226 = vadd.s32 %v208, %v221
        %v227 = vadd.s32 %v209, %v221
        %v228 = vadd.s32 %v210, %v221
        %v229 = vadd.s32 %v211, %v221
        %v230 = vadd.s32 %v212, %v221
        %v231 = vadd.s32 %v213, %v221
        %v232 = vadd.s32 %v214, %v221
        %v233 = vadd.s32 %v215, %v221
        %v234 = vadd.s32 %v216, %v221
        %v235 = vadd.s32 %v217, %v221
        %v236 = vadd.s32 %v218, %v221
        %v237 = vadd.s32 %v219, %v221
        %vm238 = vcmp.lt.s32.totalorder %v222, 128
        %vm239 = vcmp.lt.s32.totalorder %v223, 128
        %vm240 = vcmp.lt.s32.totalorder %v224, 128
        %vm241 = vcmp.lt.s32.totalorder %v225, 128
        %vm242 = vcmp.lt.s32.totalorder %v226, 128
        %vm243 = vcmp.lt.s32.totalorder %v227, 128
        %vm244 = vcmp.lt.s32.totalorder %v228, 128
        %vm245 = vcmp.lt.s32.totalorder %v229, 128
        %vm246 = vcmp.lt.s32.totalorder %v230, 128
        %vm247 = vcmp.lt.s32.totalorder %v231, 128
        %vm248 = vcmp.lt.s32.totalorder %v232, 128
        %vm249 = vcmp.lt.s32.totalorder %v233, 128
        %vm250 = vcmp.lt.s32.totalorder %v234, 128
        %vm251 = vcmp.lt.s32.totalorder %v235, 128
        %vm252 = vcmp.lt.s32.totalorder %v236, 128
        %vm253 = vcmp.lt.s32.totalorder %v237, 128
        %v254 = vsel %vm238, 1, 0
        %v255 = vsel %vm239, 1, 0
        %v256 = vsel %vm240, 1, 0
        %v257 = vsel %vm241, 1, 0
        %v258 = vsel %vm242, 1, 0
        %v259 = vsel %vm243, 1, 0
        %v260 = vsel %vm244, 1, 0
        %v261 = vsel %vm245, 1, 0
        %v262 = vsel %vm246, 1, 0
        %v263 = vsel %vm247, 1, 0
        %v264 = vsel %vm248, 1, 0
        %v265 = vsel %vm249, 1, 0
        %v266 = vsel %vm250, 1, 0
        %v267 = vsel %vm251, 1, 0
        %v268 = vsel %vm252, 1, 0
        %v269 = vsel %vm253, 1, 0
        %v270 = vcvt.s32.f32 %v254
        %v271 = vcvt.s32.f32 %v255
        %v272 = vcvt.s32.f32 %v256
        %v273 = vcvt.s32.f32 %v257
        %v274 = vcvt.s32.f32 %v258
        %v275 = vcvt.s32.f32 %v259
        %v276 = vcvt.s32.f32 %v260
        %v277 = vcvt.s32.f32 %v261
        %v278 = vcvt.s32.f32 %v262
        %v279 = vcvt.s32.f32 %v263
        %v280 = vcvt.s32.f32 %v264
        %v281 = vcvt.s32.f32 %v265
        %v282 = vcvt.s32.f32 %v266
        %v283 = vcvt.s32.f32 %v267
        %v284 = vcvt.s32.f32 %v268
        %v285 = vcvt.s32.f32 %v269
        %v287 = vrot.slane %v186, 6
        %v289 = vsub.f32 %v186, %v287
        %v291 = vrot.slane %v289, 1
        %v293 = vmul.f32 %v289, %v291
        %310 = vrot.lane.b32.xlu0 %v187, 2
        %v311 = vpop.permute.xlu0 %310
        %312 = vrot.lane.b32.xlu0 %v188, 2
        %v313 = vpop.permute.xlu0 %312
        %314 = vrot.lane.b32.xlu0 %v189, 2
        %v315 = vpop.permute.xlu0 %314
        %316 = vrot.lane.b32.xlu0 %v190, 2
        %v317 = vpop.permute.xlu0 %316
        %318 = vrot.lane.b32.xlu0 %v191, 2
        %v319 = vpop.permute.xlu0 %318
        %320 = vrot.lane.b32.xlu0 %v192, 2
        %v321 = vpop.permute.xlu0 %320
        %322 = vrot.lane.b32.xlu0 %v193, 2
        %v323 = vpop.permute.xlu0 %322
        %324 = vrot.lane.b32.xlu0 %v194, 2
        %v325 = vpop.permute.xlu0 %324
        %326 = vrot.lane.b32.xlu0 %v195, 2
        %v327 = vpop.permute.xlu0 %326
        %328 = vrot.lane.b32.xlu0 %v196, 2
        %v329 = vpop.permute.xlu0 %328
        %330 = vrot.lane.b32.xlu0 %v197, 2
        %v331 = vpop.permute.xlu0 %330
        %332 = vrot.lane.b32.xlu0 %v198, 2
        %v333 = vpop.permute.xlu0 %332
        %334 = vrot.lane.b32.xlu0 %v199, 2
        %v335 = vpop.permute.xlu0 %334
        %336 = vrot.lane.b32.xlu0 %v200, 2
        %v337 = vpop.permute.xlu0 %336
        %338 = vrot.lane.b32.xlu0 %v201, 2
        %v339 = vpop.permute.xlu0 %338
        %340 = vrot.lane.b32.xlu0 %v202, 2
        %v341 = vpop.permute.xlu0 %340
        %v358 = vsub.f32 %v187, %v311
        %v359 = vsub.f32 %v188, %v313
        %v360 = vsub.f32 %v189, %v315
        %v361 = vsub.f32 %v190, %v317
        %v362 = vsub.f32 %v191, %v319
        %v363 = vsub.f32 %v192, %v321
        %v364 = vsub.f32 %v193, %v323
        %v365 = vsub.f32 %v194, %v325
        %v366 = vsub.f32 %v195, %v327
        %v367 = vsub.f32 %v196, %v329
        %v368 = vsub.f32 %v197, %v331
        %v369 = vsub.f32 %v198, %v333
        %v370 = vsub.f32 %v199, %v335
        %v371 = vsub.f32 %v200, %v337
        %v372 = vsub.f32 %v201, %v339
        %v373 = vsub.f32 %v202, %v341
        %390 = vrot.lane.b32.xlu0 %v358, 127
        %v391 = vpop.permute.xlu0 %390
        %392 = vrot.lane.b32.xlu0 %v359, 127
        %v393 = vpop.permute.xlu0 %392
        %394 = vrot.lane.b32.xlu0 %v360, 127
        %v395 = vpop.permute.xlu0 %394
        %396 = vrot.lane.b32.xlu0 %v361, 127
        %v397 = vpop.permute.xlu0 %396
        %398 = vrot.lane.b32.xlu0 %v362, 127
        %v399 = vpop.permute.xlu0 %398
        %400 = vrot.lane.b32.xlu0 %v363, 127
        %v401 = vpop.permute.xlu0 %400
        %402 = vrot.lane.b32.xlu0 %v364, 127
        %v403 = vpop.permute.xlu0 %402
        %404 = vrot.lane.b32.xlu0 %v365, 127
        %v405 = vpop.permute.xlu0 %404
        %406 = vrot.lane.b32.xlu0 %v366, 127
        %v407 = vpop.permute.xlu0 %406
        %408 = vrot.lane.b32.xlu0 %v367, 127
        %v409 = vpop.permute.xlu0 %408
        %410 = vrot.lane.b32.xlu0 %v368, 127
        %v411 = vpop.permute.xlu0 %410
        %412 = vrot.lane.b32.xlu0 %v369, 127
        %v413 = vpop.permute.xlu0 %412
        %414 = vrot.lane.b32.xlu0 %v370, 127
        %v415 = vpop.permute.xlu0 %414
        %416 = vrot.lane.b32.xlu0 %v371, 127
        %v417 = vpop.permute.xlu0 %416
        %418 = vrot.lane.b32.xlu0 %v372, 127
        %v419 = vpop.permute.xlu0 %418
        %420 = vrot.lane.b32.xlu0 %v373, 127
        %v421 = vpop.permute.xlu0 %420
        %v438 = vmul.f32 %v358, %v391
        %v439 = vmul.f32 %v359, %v393
        %v440 = vmul.f32 %v360, %v395
        %v441 = vmul.f32 %v361, %v397
        %v442 = vmul.f32 %v362, %v399
        %v443 = vmul.f32 %v363, %v401
        %v444 = vmul.f32 %v364, %v403
        %v445 = vmul.f32 %v365, %v405
        %v446 = vmul.f32 %v366, %v407
        %v447 = vmul.f32 %v367, %v409
        %v448 = vmul.f32 %v368, %v411
        %v449 = vmul.f32 %v369, %v413
        %v450 = vmul.f32 %v370, %v415
        %v451 = vmul.f32 %v371, %v417
        %v452 = vmul.f32 %v372, %v419
        %v453 = vmul.f32 %v373, %v421
        %454 = vset.pattern.permute.xlu0 2
        %455 = vperm.xlu0 %454, %v187
        %v456 = vpop.permute.xlu0 %455
        %458 = vset.pattern.permute.xlu0 2
        %459 = vperm.xlu0 %458, %v188
        %v460 = vpop.permute.xlu0 %459
        %462 = vset.pattern.permute.xlu0 2
        %463 = vperm.xlu0 %462, %v189
        %v464 = vpop.permute.xlu0 %463
        %466 = vset.pattern.permute.xlu0 2
        %467 = vperm.xlu0 %466, %v190
        %v468 = vpop.permute.xlu0 %467
        %470 = vset.pattern.permute.xlu0 2
        %471 = vperm.xlu0 %470, %v191
        %v472 = vpop.permute.xlu0 %471
        %474 = vset.pattern.permute.xlu0 2
        %475 = vperm.xlu0 %474, %v192
        %v476 = vpop.permute.xlu0 %475
        %478 = vset.pattern.permute.xlu0 2
        %479 = vperm.xlu0 %478, %v193
        %v480 = vpop.permute.xlu0 %479
        %482 = vset.pattern.permute.xlu0 2
        %483 = vperm.xlu0 %482, %v194
        %v484 = vpop.permute.xlu0 %483
        %486 = vset.pattern.permute.xlu0 2
        %487 = vperm.xlu0 %486, %v195
        %v488 = vpop.permute.xlu0 %487
        %490 = vset.pattern.permute.xlu0 2
        %491 = vperm.xlu0 %490, %v196
        %v492 = vpop.permute.xlu0 %491
        %494 = vset.pattern.permute.xlu0 2
        %495 = vperm.xlu0 %494, %v197
        %v496 = vpop.permute.xlu0 %495
        %498 = vset.pattern.permute.xlu0 2
        %499 = vperm.xlu0 %498, %v198
        %v500 = vpop.permute.xlu0 %499
        %502 = vset.pattern.permute.xlu0 2
        %503 = vperm.xlu0 %502, %v199
        %v504 = vpop.permute.xlu0 %503
        %506 = vset.pattern.permute.xlu0 2
        %507 = vperm.xlu0 %506, %v200
        %v508 = vpop.permute.xlu0 %507
        %510 = vset.pattern.permute.xlu0 2
        %511 = vperm.xlu0 %510, %v201
        %v512 = vpop.permute.xlu0 %511
        %514 = vset.pattern.permute.xlu0 2
        %515 = vperm.xlu0 %514, %v202
        %v516 = vpop.permute.xlu0 %515
        %v518 = vperm.slane %v186, 2
        %v519 = vmin.f32 %v456, %v518
        %v520 = vmin.f32 %v460, %v518
        %v521 = vmin.f32 %v464, %v518
        %v522 = vmin.f32 %v468, %v518
        %v523 = vmin.f32 %v472, %v518
        %v524 = vmin.f32 %v476, %v518
        %v525 = vmin.f32 %v480, %v518
        %v526 = vmin.f32 %v484, %v518
        %v527 = vmin.f32 %v488, %v518
        %v528 = vmin.f32 %v492, %v518
        %v529 = vmin.f32 %v496, %v518
        %v530 = vmin.f32 %v500, %v518
        %v531 = vmin.f32 %v504, %v518
        %v532 = vmin.f32 %v508, %v518
        %v533 = vmin.f32 %v512, %v518
        %v534 = vmin.f32 %v516, %v518
        %535 = vset.pattern.permute.xlu0 0
        %536 = vperm.xlu0 %535, %v187
        %v537 = vpop.permute.xlu0 %536
        %539 = vset.pattern.permute.xlu0 0
        %540 = vperm.xlu0 %539, %v188
        %v541 = vpop.permute.xlu0 %540
        %543 = vset.pattern.permute.xlu0 0
        %544 = vperm.xlu0 %543, %v189
        %v545 = vpop.permute.xlu0 %544
        %547 = vset.pattern.permute.xlu0 0
        %548 = vperm.xlu0 %547, %v190
        %v549 = vpop.permute.xlu0 %548
        %551 = vset.pattern.permute.xlu0 0
        %552 = vperm.xlu0 %551, %v191
        %v553 = vpop.permute.xlu0 %552
        %555 = vset.pattern.permute.xlu0 0
        %556 = vperm.xlu0 %555, %v192
        %v557 = vpop.permute.xlu0 %556
        %559 = vset.pattern.permute.xlu0 0
        %560 = vperm.xlu0 %559, %v193
        %v561 = vpop.permute.xlu0 %560
        %563 = vset.pattern.permute.xlu0 0
        %564 = vperm.xlu0 %563, %v194
        %v565 = vpop.permute.xlu0 %564
        %567 = vset.pattern.permute.xlu0 0
        %568 = vperm.xlu0 %567, %v195
        %v569 = vpop.permute.xlu0 %568
        %571 = vset.pattern.permute.xlu0 0
        %572 = vperm.xlu0 %571, %v196
        %v573 = vpop.permute.xlu0 %572
        %575 = vset.pattern.permute.xlu0 0
        %576 = vperm.xlu0 %575, %v197
        %v577 = vpop.permute.xlu0 %576
        %579 = vset.pattern.permute.xlu0 0
        %580 = vperm.xlu0 %579, %v198
        %v581 = vpop.permute.xlu0 %580
        %583 = vset.pattern.permute.xlu0 0
        %584 = vperm.xlu0 %583, %v199
        %v585 = vpop.permute.xlu0 %584
        %587 = vset.pattern.permute.xlu0 0
        %588 = vperm.xlu0 %587, %v200
        %v589 = vpop.permute.xlu0 %588
        %591 = vset.pattern.permute.xlu0 0
        %592 = vperm.xlu0 %591, %v201
        %v593 = vpop.permute.xlu0 %592
        %595 = vset.pattern.permute.xlu0 0
        %596 = vperm.xlu0 %595, %v202
        %v597 = vpop.permute.xlu0 %596
        %v599 = vperm.slane %v186, 0
        %v600 = vmax.f32 %v537, %v599
        %v601 = vmax.f32 %v541, %v599
        %v602 = vmax.f32 %v545, %v599
        %v603 = vmax.f32 %v549, %v599
        %v604 = vmax.f32 %v553, %v599
        %v605 = vmax.f32 %v557, %v599
        %v606 = vmax.f32 %v561, %v599
        %v607 = vmax.f32 %v565, %v599
        %v608 = vmax.f32 %v569, %v599
        %v609 = vmax.f32 %v573, %v599
        %v610 = vmax.f32 %v577, %v599
        %v611 = vmax.f32 %v581, %v599
        %v612 = vmax.f32 %v585, %v599
        %v613 = vmax.f32 %v589, %v599
        %v614 = vmax.f32 %v593, %v599
        %v615 = vmax.f32 %v597, %v599
        %v616 = vsub.f32 %v519, %v600
        %v617 = vsub.f32 %v520, %v601
        %v618 = vsub.f32 %v521, %v602
        %v619 = vsub.f32 %v522, %v603
        %v620 = vsub.f32 %v523, %v604
        %v621 = vsub.f32 %v524, %v605
        %v622 = vsub.f32 %v525, %v606
        %v623 = vsub.f32 %v526, %v607
        %v624 = vsub.f32 %v527, %v608
        %v625 = vsub.f32 %v528, %v609
        %v626 = vsub.f32 %v529, %v610
        %v627 = vsub.f32 %v530, %v611
        %v628 = vsub.f32 %v531, %v612
        %v629 = vsub.f32 %v532, %v613
        %v630 = vsub.f32 %v533, %v614
        %v631 = vsub.f32 %v534, %v615
        %v632 = vmax.f32 %v616, 0.0
        %v633 = vmax.f32 %v617, 0.0
        %v634 = vmax.f32 %v618, 0.0
        %v635 = vmax.f32 %v619, 0.0
        %v636 = vmax.f32 %v620, 0.0
        %v637 = vmax.f32 %v621, 0.0
        %v638 = vmax.f32 %v622, 0.0
        %v639 = vmax.f32 %v623, 0.0
        %v640 = vmax.f32 %v624, 0.0
        %v641 = vmax.f32 %v625, 0.0
        %v642 = vmax.f32 %v626, 0.0
        %v643 = vmax.f32 %v627, 0.0
        %v644 = vmax.f32 %v628, 0.0
        %v645 = vmax.f32 %v629, 0.0
        %v646 = vmax.f32 %v630, 0.0
        %v647 = vmax.f32 %v631, 0.0
        %648 = vset.pattern.permute.xlu0 3
        %649 = vperm.xlu0 %648, %v187
        %v650 = vpop.permute.xlu0 %649
        %652 = vset.pattern.permute.xlu0 3
        %653 = vperm.xlu0 %652, %v188
        %v654 = vpop.permute.xlu0 %653
        %656 = vset.pattern.permute.xlu0 3
        %657 = vperm.xlu0 %656, %v189
        %v658 = vpop.permute.xlu0 %657
        %660 = vset.pattern.permute.xlu0 3
        %661 = vperm.xlu0 %660, %v190
        %v662 = vpop.permute.xlu0 %661
        %664 = vset.pattern.permute.xlu0 3
        %665 = vperm.xlu0 %664, %v191
        %v666 = vpop.permute.xlu0 %665
        %668 = vset.pattern.permute.xlu0 3
        %669 = vperm.xlu0 %668, %v192
        %v670 = vpop.permute.xlu0 %669
        %672 = vset.pattern.permute.xlu0 3
        %673 = vperm.xlu0 %672, %v193
        %v674 = vpop.permute.xlu0 %673
        %676 = vset.pattern.permute.xlu0 3
        %677 = vperm.xlu0 %676, %v194
        %v678 = vpop.permute.xlu0 %677
        %680 = vset.pattern.permute.xlu0 3
        %681 = vperm.xlu0 %680, %v195
        %v682 = vpop.permute.xlu0 %681
        %684 = vset.pattern.permute.xlu0 3
        %685 = vperm.xlu0 %684, %v196
        %v686 = vpop.permute.xlu0 %685
        %688 = vset.pattern.permute.xlu0 3
        %689 = vperm.xlu0 %688, %v197
        %v690 = vpop.permute.xlu0 %689
        %692 = vset.pattern.permute.xlu0 3
        %693 = vperm.xlu0 %692, %v198
        %v694 = vpop.permute.xlu0 %693
        %696 = vset.pattern.permute.xlu0 3
        %697 = vperm.xlu0 %696, %v199
        %v698 = vpop.permute.xlu0 %697
        %700 = vset.pattern.permute.xlu0 3
        %701 = vperm.xlu0 %700, %v200
        %v702 = vpop.permute.xlu0 %701
        %704 = vset.pattern.permute.xlu0 3
        %705 = vperm.xlu0 %704, %v201
        %v706 = vpop.permute.xlu0 %705
        %708 = vset.pattern.permute.xlu0 3
        %709 = vperm.xlu0 %708, %v202
        %v710 = vpop.permute.xlu0 %709
        %v712 = vperm.slane %v186, 3
        %v713 = vmin.f32 %v650, %v712
        %v714 = vmin.f32 %v654, %v712
        %v715 = vmin.f32 %v658, %v712
        %v716 = vmin.f32 %v662, %v712
        %v717 = vmin.f32 %v666, %v712
        %v718 = vmin.f32 %v670, %v712
        %v719 = vmin.f32 %v674, %v712
        %v720 = vmin.f32 %v678, %v712
        %v721 = vmin.f32 %v682, %v712
        %v722 = vmin.f32 %v686, %v712
        %v723 = vmin.f32 %v690, %v712
        %v724 = vmin.f32 %v694, %v712
        %v725 = vmin.f32 %v698, %v712
        %v726 = vmin.f32 %v702, %v712
        %v727 = vmin.f32 %v706, %v712
        %v728 = vmin.f32 %v710, %v712
        %729 = vset.pattern.permute.xlu0 1
        %730 = vperm.xlu0 %729, %v187
        %v731 = vpop.permute.xlu0 %730
        %733 = vset.pattern.permute.xlu0 1
        %734 = vperm.xlu0 %733, %v188
        %v735 = vpop.permute.xlu0 %734
        %737 = vset.pattern.permute.xlu0 1
        %738 = vperm.xlu0 %737, %v189
        %v739 = vpop.permute.xlu0 %738
        %741 = vset.pattern.permute.xlu0 1
        %742 = vperm.xlu0 %741, %v190
        %v743 = vpop.permute.xlu0 %742
        %745 = vset.pattern.permute.xlu0 1
        %746 = vperm.xlu0 %745, %v191
        %v747 = vpop.permute.xlu0 %746
        %749 = vset.pattern.permute.xlu0 1
        %750 = vperm.xlu0 %749, %v192
        %v751 = vpop.permute.xlu0 %750
        %753 = vset.pattern.permute.xlu0 1
        %754 = vperm.xlu0 %753, %v193
        %v755 = vpop.permute.xlu0 %754
        %757 = vset.pattern.permute.xlu0 1
        %758 = vperm.xlu0 %757, %v194
        %v759 = vpop.permute.xlu0 %758
        %761 = vset.pattern.permute.xlu0 1
        %762 = vperm.xlu0 %761, %v195
        %v763 = vpop.permute.xlu0 %762
        %765 = vset.pattern.permute.xlu0 1
        %766 = vperm.xlu0 %765, %v196
        %v767 = vpop.permute.xlu0 %766
        %769 = vset.pattern.permute.xlu0 1
        %770 = vperm.xlu0 %769, %v197
        %v771 = vpop.permute.xlu0 %770
        %773 = vset.pattern.permute.xlu0 1
        %774 = vperm.xlu0 %773, %v198
        %v775 = vpop.permute.xlu0 %774
        %777 = vset.pattern.permute.xlu0 1
        %778 = vperm.xlu0 %777, %v199
        %v779 = vpop.permute.xlu0 %778
        %781 = vset.pattern.permute.xlu0 1
        %782 = vperm.xlu0 %781, %v200
        %v783 = vpop.permute.xlu0 %782
        %785 = vset.pattern.permute.xlu0 1
        %786 = vperm.xlu0 %785, %v201
        %v787 = vpop.permute.xlu0 %786
        %789 = vset.pattern.permute.xlu0 1
        %790 = vperm.xlu0 %789, %v202
        %v791 = vpop.permute.xlu0 %790
        %v793 = vperm.slane %v186, 1
        %v794 = vmax.f32 %v731, %v793
        %v795 = vmax.f32 %v735, %v793
        %v796 = vmax.f32 %v739, %v793
        %v797 = vmax.f32 %v743, %v793
        %v798 = vmax.f32 %v747, %v793
        %v799 = vmax.f32 %v751, %v793
        %v800 = vmax.f32 %v755, %v793
        %v801 = vmax.f32 %v759, %v793
        %v802 = vmax.f32 %v763, %v793
        %v803 = vmax.f32 %v767, %v793
        %v804 = vmax.f32 %v771, %v793
        %v805 = vmax.f32 %v775, %v793
        %v806 = vmax.f32 %v779, %v793
        %v807 = vmax.f32 %v783, %v793
        %v808 = vmax.f32 %v787, %v793
        %v809 = vmax.f32 %v791, %v793
        %v810 = vsub.f32 %v713, %v794
        %v811 = vsub.f32 %v714, %v795
        %v812 = vsub.f32 %v715, %v796
        %v813 = vsub.f32 %v716, %v797
        %v814 = vsub.f32 %v717, %v798
        %v815 = vsub.f32 %v718, %v799
        %v816 = vsub.f32 %v719, %v800
        %v817 = vsub.f32 %v720, %v801
        %v818 = vsub.f32 %v721, %v802
        %v819 = vsub.f32 %v722, %v803
        %v820 = vsub.f32 %v723, %v804
        %v821 = vsub.f32 %v724, %v805
        %v822 = vsub.f32 %v725, %v806
        %v823 = vsub.f32 %v726, %v807
        %v824 = vsub.f32 %v727, %v808
        %v825 = vsub.f32 %v728, %v809
        %v826 = vmax.f32 %v810, 0.0
        %v827 = vmax.f32 %v811, 0.0
        %v828 = vmax.f32 %v812, 0.0
        %v829 = vmax.f32 %v813, 0.0
        %v830 = vmax.f32 %v814, 0.0
        %v831 = vmax.f32 %v815, 0.0
        %v832 = vmax.f32 %v816, 0.0
        %v833 = vmax.f32 %v817, 0.0
        %v834 = vmax.f32 %v818, 0.0
        %v835 = vmax.f32 %v819, 0.0
        %v836 = vmax.f32 %v820, 0.0
        %v837 = vmax.f32 %v821, 0.0
        %v838 = vmax.f32 %v822, 0.0
        %v839 = vmax.f32 %v823, 0.0
        %v840 = vmax.f32 %v824, 0.0
        %v841 = vmax.f32 %v825, 0.0
        %v842 = vmul.f32 %v632, %v826
        %v843 = vmul.f32 %v633, %v827
        %v844 = vmul.f32 %v634, %v828
        %v845 = vmul.f32 %v635, %v829
        %v846 = vmul.f32 %v636, %v830
        %v847 = vmul.f32 %v637, %v831
        %v848 = vmul.f32 %v638, %v832
        %v849 = vmul.f32 %v639, %v833
        %v850 = vmul.f32 %v640, %v834
        %v851 = vmul.f32 %v641, %v835
        %v852 = vmul.f32 %v642, %v836
        %v853 = vmul.f32 %v643, %v837
        %v854 = vmul.f32 %v644, %v838
        %v855 = vmul.f32 %v645, %v839
        %v856 = vmul.f32 %v646, %v840
        %v857 = vmul.f32 %v647, %v841
        %859 = vset.pattern.permute.xlu0 2
        %860 = vperm.xlu0 %859, %v438
        %v861 = vpop.permute.xlu0 %860
        %864 = vset.pattern.permute.xlu0 2
        %865 = vperm.xlu0 %864, %v439
        %v866 = vpop.permute.xlu0 %865
        %869 = vset.pattern.permute.xlu0 2
        %870 = vperm.xlu0 %869, %v440
        %v871 = vpop.permute.xlu0 %870
        %874 = vset.pattern.permute.xlu0 2
        %875 = vperm.xlu0 %874, %v441
        %v876 = vpop.permute.xlu0 %875
        %879 = vset.pattern.permute.xlu0 2
        %880 = vperm.xlu0 %879, %v442
        %v881 = vpop.permute.xlu0 %880
        %884 = vset.pattern.permute.xlu0 2
        %885 = vperm.xlu0 %884, %v443
        %v886 = vpop.permute.xlu0 %885
        %889 = vset.pattern.permute.xlu0 2
        %890 = vperm.xlu0 %889, %v444
        %v891 = vpop.permute.xlu0 %890
        %894 = vset.pattern.permute.xlu0 2
        %895 = vperm.xlu0 %894, %v445
        %v896 = vpop.permute.xlu0 %895
        %899 = vset.pattern.permute.xlu0 2
        %900 = vperm.xlu0 %899, %v446
        %v901 = vpop.permute.xlu0 %900
        %904 = vset.pattern.permute.xlu0 2
        %905 = vperm.xlu0 %904, %v447
        %v906 = vpop.permute.xlu0 %905
        %909 = vset.pattern.permute.xlu0 2
        %910 = vperm.xlu0 %909, %v448
        %v911 = vpop.permute.xlu0 %910
        %914 = vset.pattern.permute.xlu0 2
        %915 = vperm.xlu0 %914, %v449
        %v916 = vpop.permute.xlu0 %915
        %919 = vset.pattern.permute.xlu0 2
        %920 = vperm.xlu0 %919, %v450
        %v921 = vpop.permute.xlu0 %920
        %924 = vset.pattern.permute.xlu0 2
        %925 = vperm.xlu0 %924, %v451
        %v926 = vpop.permute.xlu0 %925
        %929 = vset.pattern.permute.xlu0 2
        %930 = vperm.xlu0 %929, %v452
        %v931 = vpop.permute.xlu0 %930
        %934 = vset.pattern.permute.xlu0 2
        %935 = vperm.xlu0 %934, %v453
        %v936 = vpop.permute.xlu0 %935
        %v938 = vperm.slane %v293, 2
        %v939 = vadd.f32 %v861, %v938
        %v940 = vadd.f32 %v866, %v938
        %v941 = vadd.f32 %v871, %v938
        %v942 = vadd.f32 %v876, %v938
        %v943 = vadd.f32 %v881, %v938
        %v944 = vadd.f32 %v886, %v938
        %v945 = vadd.f32 %v891, %v938
        %v946 = vadd.f32 %v896, %v938
        %v947 = vadd.f32 %v901, %v938
        %v948 = vadd.f32 %v906, %v938
        %v949 = vadd.f32 %v911, %v938
        %v950 = vadd.f32 %v916, %v938
        %v951 = vadd.f32 %v921, %v938
        %v952 = vadd.f32 %v926, %v938
        %v953 = vadd.f32 %v931, %v938
        %v954 = vadd.f32 %v936, %v938
        %v955 = vsub.f32 %v939, %v842
        %v956 = vsub.f32 %v940, %v843
        %v957 = vsub.f32 %v941, %v844
        %v958 = vsub.f32 %v942, %v845
        %v959 = vsub.f32 %v943, %v846
        %v960 = vsub.f32 %v944, %v847
        %v961 = vsub.f32 %v945, %v848
        %v962 = vsub.f32 %v946, %v849
        %v963 = vsub.f32 %v947, %v850
        %v964 = vsub.f32 %v948, %v851
        %v965 = vsub.f32 %v949, %v852
        %v966 = vsub.f32 %v950, %v853
        %v967 = vsub.f32 %v951, %v854
        %v968 = vsub.f32 %v952, %v855
        %v969 = vsub.f32 %v953, %v856
        %v970 = vsub.f32 %v954, %v857
        %v971 = vmax.f32 %v955, 1e-09
        %v972 = vmax.f32 %v956, 1e-09
        %v973 = vmax.f32 %v957, 1e-09
        %v974 = vmax.f32 %v958, 1e-09
        %v975 = vmax.f32 %v959, 1e-09
        %v976 = vmax.f32 %v960, 1e-09
        %v977 = vmax.f32 %v961, 1e-09
        %v978 = vmax.f32 %v962, 1e-09
        %v979 = vmax.f32 %v963, 1e-09
        %v980 = vmax.f32 %v964, 1e-09
        %v981 = vmax.f32 %v965, 1e-09
        %v982 = vmax.f32 %v966, 1e-09
        %v983 = vmax.f32 %v967, 1e-09
        %v984 = vmax.f32 %v968, 1e-09
        %v985 = vmax.f32 %v969, 1e-09
        %v986 = vmax.f32 %v970, 1e-09
        %v987 = vrcp.pop %v971
        %v988 = vmul.f32 %v971, %v987
        %v989 = vsub.f32 1.0, %v988
        %v990 = vmul.f32 %v987, %v989
        %v991 = vadd.f32 %v987, %v990
        %vm992 = vweird.f32 %v971
        %vm993 = vweird.f32 %v987
        %vm994 = vmor %vm992, %vm993
        %v995 = vsel %vm994, %v987, %v991
        %v996 = vand.u32 2147483647, %v971
        %vm997 = vcmp.eq.f32.partialorder %v996, 8.507059e+37
        %v998 = vand.u32 %v971, 2147483648
        %v999 = vor.u32 1.1754944e-38, %v998
        %v1000 = vsel %vm997, %v999, %v995
        %v1001 = vmul.f32 %v842, %v1000
        %v1002 = vrcp.pop %v972
        %v1003 = vmul.f32 %v972, %v1002
        %v1004 = vsub.f32 1.0, %v1003
        %v1005 = vmul.f32 %v1002, %v1004
        %v1006 = vadd.f32 %v1002, %v1005
        %vm1007 = vweird.f32 %v972
        %vm1008 = vweird.f32 %v1002
        %vm1009 = vmor %vm1007, %vm1008
        %v1010 = vsel %vm1009, %v1002, %v1006
        %v1011 = vand.u32 2147483647, %v972
        %vm1012 = vcmp.eq.f32.partialorder %v1011, 8.507059e+37
        %v1013 = vand.u32 %v972, 2147483648
        %v1014 = vor.u32 1.1754944e-38, %v1013
        %v1015 = vsel %vm1012, %v1014, %v1010
        %v1016 = vmul.f32 %v843, %v1015
        %v1017 = vrcp.pop %v973
        %v1018 = vmul.f32 %v973, %v1017
        %v1019 = vsub.f32 1.0, %v1018
        %v1020 = vmul.f32 %v1017, %v1019
        %v1021 = vadd.f32 %v1017, %v1020
        %vm1022 = vweird.f32 %v973
        %vm1023 = vweird.f32 %v1017
        %vm1024 = vmor %vm1022, %vm1023
        %v1025 = vsel %vm1024, %v1017, %v1021
        %v1026 = vand.u32 2147483647, %v973
        %vm1027 = vcmp.eq.f32.partialorder %v1026, 8.507059e+37
        %v1028 = vand.u32 %v973, 2147483648
        %v1029 = vor.u32 1.1754944e-38, %v1028
        %v1030 = vsel %vm1027, %v1029, %v1025
        %v1031 = vmul.f32 %v844, %v1030
        %v1032 = vrcp.pop %v974
        %v1033 = vmul.f32 %v974, %v1032
        %v1034 = vsub.f32 1.0, %v1033
        %v1035 = vmul.f32 %v1032, %v1034
        %v1036 = vadd.f32 %v1032, %v1035
        %vm1037 = vweird.f32 %v974
        %vm1038 = vweird.f32 %v1032
        %vm1039 = vmor %vm1037, %vm1038
        %v1040 = vsel %vm1039, %v1032, %v1036
        %v1041 = vand.u32 2147483647, %v974
        %vm1042 = vcmp.eq.f32.partialorder %v1041, 8.507059e+37
        %v1043 = vand.u32 %v974, 2147483648
        %v1044 = vor.u32 1.1754944e-38, %v1043
        %v1045 = vsel %vm1042, %v1044, %v1040
        %v1046 = vmul.f32 %v845, %v1045
        %v1047 = vrcp.pop %v975
        %v1048 = vmul.f32 %v975, %v1047
        %v1049 = vsub.f32 1.0, %v1048
        %v1050 = vmul.f32 %v1047, %v1049
        %v1051 = vadd.f32 %v1047, %v1050
        %vm1052 = vweird.f32 %v975
        %vm1053 = vweird.f32 %v1047
        %vm1054 = vmor %vm1052, %vm1053
        %v1055 = vsel %vm1054, %v1047, %v1051
        %v1056 = vand.u32 2147483647, %v975
        %vm1057 = vcmp.eq.f32.partialorder %v1056, 8.507059e+37
        %v1058 = vand.u32 %v975, 2147483648
        %v1059 = vor.u32 1.1754944e-38, %v1058
        %v1060 = vsel %vm1057, %v1059, %v1055
        %v1061 = vmul.f32 %v846, %v1060
        %v1062 = vrcp.pop %v976
        %v1063 = vmul.f32 %v976, %v1062
        %v1064 = vsub.f32 1.0, %v1063
        %v1065 = vmul.f32 %v1062, %v1064
        %v1066 = vadd.f32 %v1062, %v1065
        %vm1067 = vweird.f32 %v976
        %vm1068 = vweird.f32 %v1062
        %vm1069 = vmor %vm1067, %vm1068
        %v1070 = vsel %vm1069, %v1062, %v1066
        %v1071 = vand.u32 2147483647, %v976
        %vm1072 = vcmp.eq.f32.partialorder %v1071, 8.507059e+37
        %v1073 = vand.u32 %v976, 2147483648
        %v1074 = vor.u32 1.1754944e-38, %v1073
        %v1075 = vsel %vm1072, %v1074, %v1070
        %v1076 = vmul.f32 %v847, %v1075
        %v1077 = vrcp.pop %v977
        %v1078 = vmul.f32 %v977, %v1077
        %v1079 = vsub.f32 1.0, %v1078
        %v1080 = vmul.f32 %v1077, %v1079
        %v1081 = vadd.f32 %v1077, %v1080
        %vm1082 = vweird.f32 %v977
        %vm1083 = vweird.f32 %v1077
        %vm1084 = vmor %vm1082, %vm1083
        %v1085 = vsel %vm1084, %v1077, %v1081
        %v1086 = vand.u32 2147483647, %v977
        %vm1087 = vcmp.eq.f32.partialorder %v1086, 8.507059e+37
        %v1088 = vand.u32 %v977, 2147483648
        %v1089 = vor.u32 1.1754944e-38, %v1088
        %v1090 = vsel %vm1087, %v1089, %v1085
        %v1091 = vmul.f32 %v848, %v1090
        %v1092 = vrcp.pop %v978
        %v1093 = vmul.f32 %v978, %v1092
        %v1094 = vsub.f32 1.0, %v1093
        %v1095 = vmul.f32 %v1092, %v1094
        %v1096 = vadd.f32 %v1092, %v1095
        %vm1097 = vweird.f32 %v978
        %vm1098 = vweird.f32 %v1092
        %vm1099 = vmor %vm1097, %vm1098
        %v1100 = vsel %vm1099, %v1092, %v1096
        %v1101 = vand.u32 2147483647, %v978
        %vm1102 = vcmp.eq.f32.partialorder %v1101, 8.507059e+37
        %v1103 = vand.u32 %v978, 2147483648
        %v1104 = vor.u32 1.1754944e-38, %v1103
        %v1105 = vsel %vm1102, %v1104, %v1100
        %v1106 = vmul.f32 %v849, %v1105
        %v1107 = vrcp.pop %v979
        %v1108 = vmul.f32 %v979, %v1107
        %v1109 = vsub.f32 1.0, %v1108
        %v1110 = vmul.f32 %v1107, %v1109
        %v1111 = vadd.f32 %v1107, %v1110
        %vm1112 = vweird.f32 %v979
        %vm1113 = vweird.f32 %v1107
        %vm1114 = vmor %vm1112, %vm1113
        %v1115 = vsel %vm1114, %v1107, %v1111
        %v1116 = vand.u32 2147483647, %v979
        %vm1117 = vcmp.eq.f32.partialorder %v1116, 8.507059e+37
        %v1118 = vand.u32 %v979, 2147483648
        %v1119 = vor.u32 1.1754944e-38, %v1118
        %v1120 = vsel %vm1117, %v1119, %v1115
        %v1121 = vmul.f32 %v850, %v1120
        %v1122 = vrcp.pop %v980
        %v1123 = vmul.f32 %v980, %v1122
        %v1124 = vsub.f32 1.0, %v1123
        %v1125 = vmul.f32 %v1122, %v1124
        %v1126 = vadd.f32 %v1122, %v1125
        %vm1127 = vweird.f32 %v980
        %vm1128 = vweird.f32 %v1122
        %vm1129 = vmor %vm1127, %vm1128
        %v1130 = vsel %vm1129, %v1122, %v1126
        %v1131 = vand.u32 2147483647, %v980
        %vm1132 = vcmp.eq.f32.partialorder %v1131, 8.507059e+37
        %v1133 = vand.u32 %v980, 2147483648
        %v1134 = vor.u32 1.1754944e-38, %v1133
        %v1135 = vsel %vm1132, %v1134, %v1130
        %v1136 = vmul.f32 %v851, %v1135
        %v1137 = vrcp.pop %v981
        %v1138 = vmul.f32 %v981, %v1137
        %v1139 = vsub.f32 1.0, %v1138
        %v1140 = vmul.f32 %v1137, %v1139
        %v1141 = vadd.f32 %v1137, %v1140
        %vm1142 = vweird.f32 %v981
        %vm1143 = vweird.f32 %v1137
        %vm1144 = vmor %vm1142, %vm1143
        %v1145 = vsel %vm1144, %v1137, %v1141
        %v1146 = vand.u32 2147483647, %v981
        %vm1147 = vcmp.eq.f32.partialorder %v1146, 8.507059e+37
        %v1148 = vand.u32 %v981, 2147483648
        %v1149 = vor.u32 1.1754944e-38, %v1148
        %v1150 = vsel %vm1147, %v1149, %v1145
        %v1151 = vmul.f32 %v852, %v1150
        %v1152 = vrcp.pop %v982
        %v1153 = vmul.f32 %v982, %v1152
        %v1154 = vsub.f32 1.0, %v1153
        %v1155 = vmul.f32 %v1152, %v1154
        %v1156 = vadd.f32 %v1152, %v1155
        %vm1157 = vweird.f32 %v982
        %vm1158 = vweird.f32 %v1152
        %vm1159 = vmor %vm1157, %vm1158
        %v1160 = vsel %vm1159, %v1152, %v1156
        %v1161 = vand.u32 2147483647, %v982
        %vm1162 = vcmp.eq.f32.partialorder %v1161, 8.507059e+37
        %v1163 = vand.u32 %v982, 2147483648
        %v1164 = vor.u32 1.1754944e-38, %v1163
        %v1165 = vsel %vm1162, %v1164, %v1160
        %v1166 = vmul.f32 %v853, %v1165
        %v1167 = vrcp.pop %v983
        %v1168 = vmul.f32 %v983, %v1167
        %v1169 = vsub.f32 1.0, %v1168
        %v1170 = vmul.f32 %v1167, %v1169
        %v1171 = vadd.f32 %v1167, %v1170
        %vm1172 = vweird.f32 %v983
        %vm1173 = vweird.f32 %v1167
        %vm1174 = vmor %vm1172, %vm1173
        %v1175 = vsel %vm1174, %v1167, %v1171
        %v1176 = vand.u32 2147483647, %v983
        %vm1177 = vcmp.eq.f32.partialorder %v1176, 8.507059e+37
        %v1178 = vand.u32 %v983, 2147483648
        %v1179 = vor.u32 1.1754944e-38, %v1178
        %v1180 = vsel %vm1177, %v1179, %v1175
        %v1181 = vmul.f32 %v854, %v1180
        %v1182 = vrcp.pop %v984
        %v1183 = vmul.f32 %v984, %v1182
        %v1184 = vsub.f32 1.0, %v1183
        %v1185 = vmul.f32 %v1182, %v1184
        %v1186 = vadd.f32 %v1182, %v1185
        %vm1187 = vweird.f32 %v984
        %vm1188 = vweird.f32 %v1182
        %vm1189 = vmor %vm1187, %vm1188
        %v1190 = vsel %vm1189, %v1182, %v1186
        %v1191 = vand.u32 2147483647, %v984
        %vm1192 = vcmp.eq.f32.partialorder %v1191, 8.507059e+37
        %v1193 = vand.u32 %v984, 2147483648
        %v1194 = vor.u32 1.1754944e-38, %v1193
        %v1195 = vsel %vm1192, %v1194, %v1190
        %v1196 = vmul.f32 %v855, %v1195
        %v1197 = vrcp.pop %v985
        %v1198 = vmul.f32 %v985, %v1197
        %v1199 = vsub.f32 1.0, %v1198
        %v1200 = vmul.f32 %v1197, %v1199
        %v1201 = vadd.f32 %v1197, %v1200
        %vm1202 = vweird.f32 %v985
        %vm1203 = vweird.f32 %v1197
        %vm1204 = vmor %vm1202, %vm1203
        %v1205 = vsel %vm1204, %v1197, %v1201
        %v1206 = vand.u32 2147483647, %v985
        %vm1207 = vcmp.eq.f32.partialorder %v1206, 8.507059e+37
        %v1208 = vand.u32 %v985, 2147483648
        %v1209 = vor.u32 1.1754944e-38, %v1208
        %v1210 = vsel %vm1207, %v1209, %v1205
        %v1211 = vmul.f32 %v856, %v1210
        %v1212 = vrcp.pop %v986
        %v1213 = vmul.f32 %v986, %v1212
        %v1214 = vsub.f32 1.0, %v1213
        %v1215 = vmul.f32 %v1212, %v1214
        %v1216 = vadd.f32 %v1212, %v1215
        %vm1217 = vweird.f32 %v986
        %vm1218 = vweird.f32 %v1212
        %vm1219 = vmor %vm1217, %vm1218
        %v1220 = vsel %vm1219, %v1212, %v1216
        %v1221 = vand.u32 2147483647, %v986
        %vm1222 = vcmp.eq.f32.partialorder %v1221, 8.507059e+37
        %v1223 = vand.u32 %v986, 2147483648
        %v1224 = vor.u32 1.1754944e-38, %v1223
        %v1225 = vsel %vm1222, %v1224, %v1220
        %v1226 = vmul.f32 %v857, %v1225
        %v1227 = vmul.f32 %v1001, %v270
        %v1228 = vmul.f32 %v1016, %v271
        %v1229 = vmul.f32 %v1031, %v272
        %v1230 = vmul.f32 %v1046, %v273
        %v1231 = vmul.f32 %v1061, %v274
        %v1232 = vmul.f32 %v1076, %v275
        %v1233 = vmul.f32 %v1091, %v276
        %v1234 = vmul.f32 %v1106, %v277
        %v1235 = vmul.f32 %v1121, %v278
        %v1236 = vmul.f32 %v1136, %v279
        %v1237 = vmul.f32 %v1151, %v280
        %v1238 = vmul.f32 %v1166, %v281
        %v1239 = vmul.f32 %v1181, %v282
        %v1240 = vmul.f32 %v1196, %v283
        %v1241 = vmul.f32 %v1211, %v284
        %v1242 = vmul.f32 %v1226, %v285
        %vm1243 = vcmask 64512
        %v1244 = vsel %vm1243, %v1227, -inf
        %v1245 = vsel %vm1243, %v1228, -inf
        %v1246 = vsel %vm1243, %v1229, -inf
        %v1247 = vsel %vm1243, %v1230, -inf
        %v1248 = vsel %vm1243, %v1231, -inf
        %v1249 = vmax.f32 %v1244, %v1248
        %v1250 = vsel %vm1243, %v1232, -inf
        %v1251 = vmax.f32 %v1245, %v1250
        %v1252 = vsel %vm1243, %v1233, -inf
        %v1253 = vmax.f32 %v1246, %v1252
        %v1254 = vsel %vm1243, %v1234, -inf
        %v1255 = vmax.f32 %v1247, %v1254
        %v1256 = vsel %vm1243, %v1235, -inf
        %v1257 = vmax.f32 %v1249, %v1256
        %v1258 = vsel %vm1243, %v1236, -inf
        %v1259 = vmax.f32 %v1251, %v1258
        %v1260 = vsel %vm1243, %v1237, -inf
        %v1261 = vmax.f32 %v1253, %v1260
        %v1262 = vsel %vm1243, %v1238, -inf
        %v1263 = vmax.f32 %v1255, %v1262
        %v1264 = vsel %vm1243, %v1239, -inf
        %v1265 = vmax.f32 %v1257, %v1264
        %v1266 = vsel %vm1243, %v1240, -inf
        %v1267 = vmax.f32 %v1259, %v1266
        %v1268 = vsel %vm1243, %v1241, -inf
        %v1269 = vmax.f32 %v1261, %v1268
        %v1270 = vsel %vm1243, %v1242, -inf
        %v1271 = vmax.f32 %v1263, %v1270
        %v1272 = vmax.f32 %v1265, %v1267
        %v1273 = vmax.f32 %v1269, %v1271
        %v1274 = vmax.f32 %v1272, %v1273
        %v1275 = vrot.slane %v1274, 4
        %v1276 = vmax.f32 %v1274, %v1275
        %v1277 = vrot.slane %v1276, 2
        %v1278 = vmax.f32 %v1276, %v1277
        %v1279 = vrot.slane %v1278, 1
        %v1280 = vmax.f32 %v1278, %v1279
        %p1281 = scmp.eq.s32.totalorder %s21, 0
        // Predicated region
        $region29: #{tpu_custom_call.1} parent=27 // pred_check
          %p1282 = pneg %p1281
        $region30: #{tpu_custom_call.1} parent=27 // pred_check_branch
          %1284 = sbr.rel (%p1282) target = $region32
        $region31: #{tpu_custom_call.1} parent=27 // pred_region
          %vm1285 = vcmask 57344
          %1286 = vst.msk [vmem:[%s171] sm:$0x1] %vm1285, 0.0
        $region32: #{tpu_custom_call.1} parent=27 // pred_fallthru
          _
        %v1287 = vld [vmem:[%s171] sm:$0x1]
        %v1288 = vmax.f32 %v1287, %v1280
        %vm1289 = vcmask 57344
        %1290 = vst.msk [vmem:[%s171] sm:$0x1] %vm1289, %v1288
        %s1291 = sand.u32 %s90, 1
        %s1292 = scalar_lea.sflag [#allocation3], %s1291
        %s1293 = sand.u32 %s90, 1
        %s1294 = scalar_lea.vmem [#allocation2], %s1293
        // Predicated region
        $region33: #{tpu_custom_call.1} parent=27 // pred_check
          %p1295 = pneg %p100
        $region34: #{tpu_custom_call.1} parent=27 // pred_check_branch
          %1297 = sbr.rel (%p1295) target = $region36
        $region35: #{tpu_custom_call.1} parent=27 // pred_region
          %1299 = vsyncadd %s1292, 0
          %s1300 = scalar_lea.hbm %s2, %s20
          %s1302 = sshll.u32 %s1294, 4
          %s1303 = int_to_ptr.vmem [resolvable:$true] %s1302
          %s1304 = sshll.u32 %s1300, 4
          %s1305 = int_to_ptr.hbm [resolvable:$true] %s1304
          %1307 = dma.vmem_to_hbm [thread:$0]  %s1303, 16, %s1305, %s1292
        $region36: #{tpu_custom_call.1} parent=27 // pred_fallthru
          _
      $region28: #{tpu_custom_call.1} parent=5 // pred_fallthru
        _
      %p1308 = scmp.le.s32.totalorder 2, %s11
      // Predicated region
      $region37: #{tpu_custom_call.1} parent=5 // pred_check
        %p1309 = pneg %p1308
      $region38: #{tpu_custom_call.1} parent=5 // pred_check_branch
        %1311 = sbr.rel (%p1309) target = $region40
      $region39: #{tpu_custom_call.1} parent=5 // pred_region
        %s1312 = ssub.s32 %s11, 2
        // Predicated region
        $region41: #{tpu_custom_call.1} parent=39 // pred_check
          %p1313 = pneg %p106
        $region42: #{tpu_custom_call.1} parent=39 // pred_check_branch
          %1315 = sbr.rel (%p1313) target = $region44
        $region43: #{tpu_custom_call.1} parent=39 // pred_region
          %s1316 = sand.u32 %s91, 1
          %s1317 = scalar_lea.sflag [#allocation3], %s1316
          %s1318 = sand.u32 %s91, 1
          %s1319 = scalar_lea.vmem [#allocation2], %s1318
          %1321 = dma.done %s1317, 16
        $region44: #{tpu_custom_call.1} parent=39 // pred_fallthru
          _
      $region40: #{tpu_custom_call.1} parent=5 // pred_fallthru
        _
    $region6: #{tpu_custom_call.1} parent=1 // loop_footer
      %s15 = sadd.s32 1, %s11
    $region7: #{tpu_custom_call.1} parent=1 // loop_footer_branch
      %10 = sbr.rel target = $region3
    $region8: #{tpu_custom_call.1} parent=1 // loop_exit
      _
    %1322 = vsyncpa [#allocation3], 1
    %s1323 = scalar_lea.sflag [#allocation3], 1
    %1324 = vsyncpa %s1323, 1

</llo_original>
